<compile_context>
chip_gen: v6e
topology: v6e:2x2x1
jax: 0.10.0
libtpu: 0.0.40
codegen_flags: <defaults>
</compile_context>

<pallas_src>
import functools

import jax
import jax.numpy as jnp
from jax import lax
from jax.experimental import pallas as pl
from jax.experimental.pallas import tpu as pltpu

_TARGET_BLOCK_BYTES = 4 * 1024 * 1024  # ~4 MiB/block: elementwise HBM-roofline plateau

_INV_SQRT2 = 0.7071067811865476
_SQRT_2_OVER_PI = 0.7978845608028654
_TANH_COEFF = 0.044715


def _gelu_f32(xf, approximate):
    """GELU on an f32 array; erf form (torch default) or tanh form."""
    if approximate == "tanh":
        inner = jnp.float32(_SQRT_2_OVER_PI) * (xf + jnp.float32(_TANH_COEFF) * xf * xf * xf)
        return 0.5 * xf * (1.0 + jnp.tanh(inner))
    return 0.5 * xf * (1.0 + lax.erf(xf * jnp.float32(_INV_SQRT2)))


def _capped_gelu_kernel(x_ref, o_ref, *, cap_value, approximate):
    """Elementwise GELU + cap. GELU computed in f32 (portable across v5e/v6e/v7x;
    v5e has no bf16 VPU/EUP). Clamp applied in the output dtype (torch semantics).
    NOTE: on v6e/v7x with bf16 activations a native-bf16 compute path would roughly
    double VALU throughput; kept in f32 here for portability."""
    g = _gelu_f32(x_ref[...].astype(jnp.float32), approximate)
    cap = jnp.asarray(cap_value, dtype=o_ref.dtype)
    o_ref[...] = jnp.minimum(g.astype(o_ref.dtype), cap)


def _capped_gelu_jnp(x, cap_value, approximate):
    """Plain-jnp fallback for tiny ragged tails (< 128 elements)."""
    g = _gelu_f32(x.astype(jnp.float32), approximate)
    return jnp.minimum(g.astype(x.dtype), jnp.asarray(cap_value, dtype=x.dtype))


def _capped_gelu_2d(x2d, cap_value, approximate, in_place):
    rows, lanes = x2d.shape
    bytes_per_row = lanes * x2d.dtype.itemsize

    # Target ~4 MiB per block, rows a multiple of 32 sublanes (covers f32/bf16/i8 packing).
    row_block = max(32, (_TARGET_BLOCK_BYTES // bytes_per_row) // 32 * 32)
    if row_block >= rows:
        if rows >= 64:
            # Split into 2 blocks so a 2-TC chip (v7x) can shard the parallel grid axis
            # instead of pinning everything to one core.
            row_block = ((pl.cdiv(rows, 2) + 31) // 32) * 32
        else:
            row_block = rows  # full-extent block (always a legal block shape)
    grid = (pl.cdiv(rows, row_block),)

    kernel = functools.partial(
        _capped_gelu_kernel, cap_value=float(cap_value), approximate=approximate
    )
    extra_kwargs = {}
    if in_place:
        # Caller promises the activation is donate-able: alias input 0 with output 0.
        extra_kwargs["input_output_aliases"] = {0: 0}

    return pl.pallas_call(
        kernel,
        out_shape=jax.ShapeDtypeStruct((rows, lanes), x2d.dtype),
        grid_spec=pltpu.PrefetchScalarGridSpec(
            num_scalar_prefetch=0,
            grid=grid,
            in_specs=[pl.BlockSpec((row_block, lanes), lambda i: (i, 0))],
            out_specs=pl.BlockSpec((row_block, lanes), lambda i: (i, 0)),
        ),
        compiler_params=pltpu.CompilerParams(
            dimension_semantics=(pltpu.PARALLEL,),
            vmem_limit_bytes=32 * 1024 * 1024,  # 4 blocks x 4 MiB double-buffered fits easily
        ),
        **extra_kwargs,
    )(x2d)


def capped_gelu(x: jax.Array, cap_value: float = 1.0, approximate: str = "none",
                in_place: bool = False) -> jax.Array:
    """Apply CappedGELU elementwise to an array of any shape (e.g. NCHW)."""
    orig_shape = x.shape
    n = x.size
    if n == 0:
        return x

    x_flat = jnp.reshape(x, (n,))

    # Widest lane-dense last dim that divides n exactly -> copy-free reshape, pure Pallas.
    lanes = None
    for cand in (1024, 512, 256, 128):
        if n % cand == 0:
            lanes = cand
            break
    if lanes is not None:
        out2d = _capped_gelu_2d(jnp.reshape(x_flat, (n // lanes, lanes)),
                                cap_value, approximate, in_place)
        return jnp.reshape(out2d, orig_shape)

    # Ragged case: bulk (128-aligned prefix) through the kernel, tiny (<128-elem) tail in jnp.
    nb = (n // 128) * 128
    if nb == 0:
        # Entire array smaller than one lane group — not worth a kernel launch.
        return jnp.reshape(_capped_gelu_jnp(x_flat, cap_value, approximate), orig_shape)

    bulk_lanes = 128
    for cand in (1024, 512, 256):
        if nb % cand == 0:
            bulk_lanes = cand
            break
    bulk2d = jnp.reshape(x_flat[:nb], (nb // bulk_lanes, bulk_lanes))
    bulk_out = _capped_gelu_2d(bulk2d, cap_value, approximate, in_place)
    tail_out = _capped_gelu_jnp(x_flat[nb:], cap_value, approximate)
    out_flat = jnp.concatenate([jnp.reshape(bulk_out, (nb,)), tail_out])
    return jnp.reshape(out_flat, orig_shape)


def _reference(x, cap_value=1.0, approximate="none"):
    g = _gelu_f32(x.astype(jnp.float32), approximate)
    return jnp.minimum(g.astype(x.dtype), jnp.asarray(cap_value, dtype=x.dtype))


if __name__ == "__main__":
    keys = jax.random.split(jax.random.PRNGKey(0), 3)

    # 1) NCHW input, consistent with CappedGELU usage inside HEALPix conv blocks.
    x1 = jax.random.normal(keys[0], (2, 4, 16, 16), dtype=jnp.float32) * 3.0
    out1 = jax.block_until_ready(capped_gelu(x1, cap_value=1.0))
    assert out1.shape == x1.shape and out1.dtype == x1.dtype
    assert jnp.allclose(out1, _reference(x1, 1.0), atol=1e-5, rtol=1e-5)

    # 2) Larger lane-dense shape: exercises the multi-block (grid >= 2) path.
    x2 = jax.random.normal(keys[1], (2, 4, 64, 128), dtype=jnp.float32) * 3.0
    out2 = jax.block_until_ready(capped_gelu(x2, cap_value=1.0))
    assert jnp.allclose(out2, _reference(x2, 1.0), atol=1e-5, rtol=1e-5)

    # 3) Non-128-divisible size: bulk kernel + tiny jnp tail path.
    x3 = jax.random.normal(keys[2], (3, 5, 43), dtype=jnp.float32) * 3.0
    out3 = jax.block_until_ready(capped_gelu(x3, cap_value=0.5))
    assert jnp.allclose(out3, _reference(x3, 0.5), atol=1e-5, rtol=1e-5)

    # 4) tanh-approximate variant (mirrors torch.nn.GELU(approximate='tanh')).
    out4 = jax.block_until_ready(capped_gelu(x1, cap_value=1.0, approximate="tanh"))
    assert jnp.allclose(out4, _reference(x1, 1.0, "tanh"), atol=1e-5, rtol=1e-5)

    # 5) Values from the module's docstring example.
    x_ex = jnp.array([[-2.0, -1.0], [0.0, 1.0], [2.0, 3.0]], dtype=jnp.float32)
    expect = jnp.array([[-0.0455, -0.1587], [0.0, 0.8413], [1.0, 1.0]], dtype=jnp.float32)
    out_ex = jax.block_until_ready(capped_gelu(x_ex, cap_value=1.0))
    assert jnp.allclose(out_ex, expect, atol=1e-3)

    print("KERNEL_OK")
</pallas_src>

<mosaic_0001>
module attributes {stable_mosaic.version = 11 : i64} {
  func.func @_capped_gelu_kernel(%arg0: i32, %arg1: memref<2x1024xf32, #tpu.memory_space<vmem>>, %arg2: memref<2x1024xf32, #tpu.memory_space<vmem>>) attributes {dimension_semantics = [#tpu.dimension_semantics<parallel>], iteration_bounds = array<i64: 1>, scalar_prefetch = 0 : i64, scratch_operands = 0 : i64, tpu.core_type = #tpu.core_type<tc>, window_params = [{transform_indices = @transform_0, window_bounds = array<i64: 2, 1024>}, {transform_indices = @transform_1, window_bounds = array<i64: 2, 1024>}]} {
    %c0 = arith.constant 0 : index
    %c0_0 = arith.constant 0 : index
    %0 = vector.load %arg1[%c0, %c0_0] : memref<2x1024xf32, #tpu.memory_space<vmem>>, vector<2x1024xf32>
    %cst = arith.constant 5.000000e-01 : f32
    %1 = vector.broadcast %cst : f32 to vector<2x1024xf32>
    %2 = arith.mulf %1, %0 : vector<2x1024xf32>
    %cst_1 = arith.constant 0.707106769 : f32
    %3 = vector.broadcast %cst_1 : f32 to vector<2x1024xf32>
    %4 = arith.mulf %0, %3 : vector<2x1024xf32>
    %5 = math.erf %4 : vector<2x1024xf32>
    %cst_2 = arith.constant 1.000000e+00 : f32
    %6 = vector.broadcast %cst_2 : f32 to vector<2x1024xf32>
    %7 = arith.addf %6, %5 : vector<2x1024xf32>
    %8 = arith.mulf %2, %7 : vector<2x1024xf32>
    %cst_3 = arith.constant 1.000000e+00 : f32
    %9 = vector.broadcast %cst_3 : f32 to vector<2x1024xf32>
    %10 = arith.minimumf %8, %9 : vector<2x1024xf32>
    %c0_4 = arith.constant 0 : index
    %c0_5 = arith.constant 0 : index
    %11 = vector.load %arg2[%c0_4, %c0_5] : memref<2x1024xf32, #tpu.memory_space<vmem>>, vector<2x1024xf32>
    tpu.vector_store %arg2[%c0_4, %c0_5], %10 {strides = array<i32>} : memref<2x1024xf32, #tpu.memory_space<vmem>>, vector<2x1024xf32>,
    return
  }
  func.func @transform_0(%arg0: i32) -> (i32, i32) {
    %c0_i32 = arith.constant 0 : i32
    %c0_i32_0 = arith.constant 0 : i32
    return %arg0, %c0_i32 : i32, i32
  }
  func.func @transform_1(%arg0: i32) -> (i32, i32) {
    %c0_i32 = arith.constant 0 : i32
    %c0_i32_0 = arith.constant 0 : i32
    return %arg0, %c0_i32 : i32, i32
  }
}

</mosaic_0001>

<llo_original>
// kernel: tpu_custom_call.1
$region0: #{tpu_custom_call.1}
  #allocation0 [shape = 'u32[]', space=smem, size = 0x4, offset = 0x4, fixed_abs, tag = 'smem constant byte address 0x4 - core index']
  #allocation1 [shape = 'u32[144,128]{1,0:T(1,128)}', space=vmem, size = 0x12000, scoped, tag = 'internal scratch']
  %s0 = inlined_call_operand.hbm [shape: f32[2,1024], index: 0, kind: input, shape index: {}]
  %s1 = inlined_call_operand.hbm [shape: f32[2,1024], index: 1, kind: output, shape index: {}]
  %s2 = sld [smem:[#allocation0]]
  $region18: #{tpu_custom_call.1} parent=0
    _
  %s4 = ssub.s32 1, %s2
  %s5 = scalar_select 0, %s4, %s2
  $region1: #{tpu_custom_call.1} parent=0
    #allocation2 [shape = 'u8[8192]{0}', space=vmem, size = 0x2000, scoped, tag = 'input window, operand 0, single buffered']
    #allocation3 [shape = 's32[1]{0}', space=sflag, size = 0x4, scoped, tag = 'scoped memory for tpu_custom_call.1']
    #allocation4 [shape = 's32[1]{0}', space=sflag, size = 0x4, scoped, tag = 'scoped memory for tpu_custom_call.1']
    #allocation5 [shape = 'u8[8192]{0}', space=vmem, size = 0x2000, scoped, tag = 'output window, operand 0, single buffered']
    %6 = vsyncpa [#allocation3], 0
    %7 = vsyncpa [#allocation4], 0
    // Predicated region
    $region2: #{tpu_custom_call.1} parent=1 // pred_check
      _
    $region3: #{tpu_custom_call.1} parent=1 // pred_check_branch
      %9 = sbr.rel (0) target = $region5
    $region4: #{tpu_custom_call.1} parent=1 // pred_region
      %s11 = ssub.s32 256, 256
      %12 = vsyncadd [#allocation3], %s11
      %s14 = sshll.u32 [#allocation2], 4
      %s15 = int_to_ptr.vmem [resolvable:$true] %s14
      %17 = dma.hbm_to_vmem [thread:$0]  %s0, 256, %s15, [#allocation3]
    $region5: #{tpu_custom_call.1} parent=1 // pred_fallthru
      _
    // Predicated region
    $region6: #{tpu_custom_call.1} parent=1 // pred_check
      _
    $region7: #{tpu_custom_call.1} parent=1 // pred_check_branch
      %19 = sbr.rel (0) target = $region9
    $region8: #{tpu_custom_call.1} parent=1 // pred_region
      %20 = dma.done [#allocation3], 256
    $region9: #{tpu_custom_call.1} parent=1 // pred_fallthru
      _
    %v21 = vld [vmem:[#allocation2] sm:$0xff]
    %v22 = vld [vmem:[#allocation2 + $0x8] sm:$0xff]
    %v23 = vmul.f32 %v21, 0.5
    %v24 = vmul.f32 %v22, 0.5
    %v25 = vmul.f32 %v21, 0.70710677
    %v26 = vmul.f32 %v22, 0.70710677
    %v27 = verf.f32.pop %v25
    %v28 = verf.f32.pop %v26
    %v29 = vadd.f32 %v27, 1.0
    %v30 = vadd.f32 %v28, 1.0
    %v31 = vmul.f32 %v23, %v29
    %v32 = vmul.f32 %v24, %v30
    %v33 = vmin.f32 %v31, 1.0
    %v34 = vmin.f32 %v32, 1.0
    %35 = vst [vmem:[#allocation5] sm:$0xff] %v33
    %36 = vst [vmem:[#allocation5 + $0x8] sm:$0xff] %v34
    // Predicated region
    $region10: #{tpu_custom_call.1} parent=1 // pred_check
      _
    $region11: #{tpu_custom_call.1} parent=1 // pred_check_branch
      %38 = sbr.rel (0) target = $region13
    $region12: #{tpu_custom_call.1} parent=1 // pred_region
      %s40 = ssub.s32 256, 256
      %41 = vsyncadd [#allocation4], %s40
      %s43 = sshll.u32 [#allocation5], 4
      %s44 = int_to_ptr.vmem [resolvable:$true] %s43
      %46 = dma.vmem_to_hbm [thread:$0]  %s44, 256, %s1, [#allocation4]
    $region13: #{tpu_custom_call.1} parent=1 // pred_fallthru
      _
    // Predicated region
    $region14: #{tpu_custom_call.1} parent=1 // pred_check
      _
    $region15: #{tpu_custom_call.1} parent=1 // pred_check_branch
      %48 = sbr.rel (0) target = $region17
    $region16: #{tpu_custom_call.1} parent=1 // pred_region
      %49 = dma.done [#allocation4], 256
    $region17: #{tpu_custom_call.1} parent=1 // pred_fallthru
      _
    %50 = vsyncpa [#allocation3], 1
    %51 = vsyncpa [#allocation4], 1

</llo_original>
